<compile_context>
chip_gen: v5e
topology: v5e:2x2
jax: 0.10.0
libtpu: 0.0.40
codegen_flags: <defaults>
</compile_context>

<pallas_src>
import functools

import jax
import jax.numpy as jnp
from jax.experimental import pallas as pl
from jax.experimental.pallas import tpu as pltpu


def _round_up(x, m):
    return ((x + m - 1) // m) * m


def _default_tiles():
    """Per-generation tile defaults keyed off VMEM capacity."""
    try:
        vmem = pltpu.get_tpu_info().vmem_capacity_bytes
    except Exception:  # interpret mode / older runtimes: be conservative.
        vmem = 64 * 1024 * 1024
    if vmem >= 100 * 1024 * 1024:
        # v5e / v6e: 128 MiB VMEM -> deeper K tiles.
        return 512, 512, 1024
    # v7x: 64 MiB physical per TC -> keep headroom.
    return 512, 512, 512


def _matmul_kernel_inplace(x_ref, w_ref, o_ref):
    """f32 output: accumulate directly into the resident output block."""
    @pl.when(pl.program_id(2) == 0)
    def _():
        o_ref[...] = jnp.zeros_like(o_ref)

    o_ref[...] += jnp.dot(
        x_ref[...], w_ref[...], preferred_element_type=jnp.float32
    )


def _matmul_kernel_acc(x_ref, w_ref, o_ref, acc_ref):
    """Narrow output dtype: accumulate in f32 scratch, cast on the last k."""
    @pl.when(pl.program_id(2) == 0)
    def _():
        acc_ref[...] = jnp.zeros_like(acc_ref)

    acc_ref[...] += jnp.dot(
        x_ref[...], w_ref[...], preferred_element_type=jnp.float32
    )

    @pl.when(pl.program_id(2) == pl.num_programs(2) - 1)
    def _():
        o_ref[...] = acc_ref[...].astype(o_ref.dtype)


@functools.partial(jax.jit, static_argnames=("tm", "tn", "tk"))
def _linear_impl(x, w, *, tm, tn, tk):
    M, K = x.shape
    K2, N = w.shape
    assert K == K2, "in_features mismatch"

    out_dtype = jnp.result_type(x.dtype, w.dtype)

    # Clamp tiles to the (alignment-rounded) problem dims, then pad the
    # problem so every tile is full: M to sublane (8), N/K to lane (128).
    tm = min(tm, _round_up(M, 8))
    tn = min(tn, _round_up(N, 128))
    tk = min(tk, _round_up(K, 128))
    Mp = _round_up(M, tm)
    Np = _round_up(N, tn)
    Kp = _round_up(K, tk)

    xp = x if (Mp == M and Kp == K) else jnp.pad(x, ((0, Mp - M), (0, Kp - K)))
    wp = w if (Kp == K and Np == N) else jnp.pad(w, ((0, Kp - K), (0, Np - N)))

    grid = (Mp // tm, Np // tn, Kp // tk)

    # f32 output accumulates in-place in the resident output block; only
    # narrower output dtypes need an f32 scratch accumulator.
    inplace = out_dtype == jnp.float32
    kernel = _matmul_kernel_inplace if inplace else _matmul_kernel_acc
    scratch_shapes = [] if inplace else [pltpu.VMEM((tm, tn), jnp.float32)]

    in_itemsize = jnp.dtype(x.dtype).itemsize
    out_itemsize = jnp.dtype(out_dtype).itemsize

    # VMEM budget: double-buffered inputs + double-buffered output (+ acc).
    need = (
        2 * (tm * tk + tk * tn) * in_itemsize
        + 2 * tm * tn * out_itemsize
        + (0 if inplace else tm * tn * 4)
    )
    vmem_limit = min(max(int(need) + (8 << 20), 32 << 20), 56 << 20)

    cost = pl.CostEstimate(
        flops=2 * Mp * Np * Kp,
        transcendentals=0,
        bytes_accessed=(Mp * Kp + Kp * Np) * in_itemsize + Mp * Np * out_itemsize,
    )

    out_p = pl.pallas_call(
        kernel,
        out_shape=jax.ShapeDtypeStruct((Mp, Np), out_dtype),
        grid_spec=pltpu.PrefetchScalarGridSpec(
            num_scalar_prefetch=0,
            grid=grid,
            in_specs=[
                pl.BlockSpec((tm, tk), lambda i, j, k: (i, k)),
                pl.BlockSpec((tk, tn), lambda i, j, k: (k, j)),
            ],
            out_specs=pl.BlockSpec((tm, tn), lambda i, j, k: (i, j)),
            scratch_shapes=scratch_shapes,
        ),
        compiler_params=pltpu.CompilerParams(
            dimension_semantics=("parallel", "parallel", "arbitrary"),
            vmem_limit_bytes=vmem_limit,
        ),
        cost_estimate=cost,
    )(xp, wp)

    if Mp == M and Np == N:
        return out_p
    return out_p[:M, :N]


def linear_layer_forward(x, w, *, tm=None, tn=None, tk=None):
    """Pallas equivalent of LinearLayer.forward: out = x @ w (torch.mm)."""
    d_tm, d_tn, d_tk = _default_tiles()
    tm = d_tm if tm is None else tm
    tn = d_tn if tn is None else tn
    tk = d_tk if tk is None else tk
    # TODO(synk): optionally cast x/w to bfloat16 here (keeping f32 accumulation)
    # for ~2-4x MXU throughput when the surrounding model tolerates it.
    return _linear_impl(x, w, tm=tm, tn=tn, tk=tk)


def xavier_uniform(key, in_features, out_features, dtype=jnp.float32):
    """Deterministic stand-in for nn.init.xavier_uniform_ on a (in, out) tensor."""
    bound = (6.0 / (in_features + out_features)) ** 0.5
    return jax.random.uniform(
        key, (in_features, out_features), dtype=dtype, minval=-bound, maxval=bound
    )


if __name__ == "__main__":
    in_features, out_features = 32, 64
    batch = 16  # number of rows fed to torch.mm

    key = jax.random.PRNGKey(0)
    k_x, k_w = jax.random.split(key)

    x = jax.random.normal(k_x, (batch, in_features), dtype=jnp.float32)
    w = xavier_uniform(k_w, in_features, out_features)

    out = linear_layer_forward(x, w)
    jax.block_until_ready(out)

    # Correctness check against plain JAX matmul (same semantics as torch.mm).
    ref = x @ w
    assert out.shape == (batch, out_features)
    assert out.dtype == ref.dtype
    assert jnp.allclose(out, ref, atol=1e-5, rtol=1e-5)

    print("KERNEL_OK")
</pallas_src>

<mosaic_0001>
module attributes {stable_mosaic.version = 11 : i64} {
  func.func @_matmul_kernel_inplace(%arg0: i32, %arg1: i32, %arg2: i32, %arg3: memref<16x128xf32, #tpu.memory_space<vmem>>, %arg4: memref<128x128xf32, #tpu.memory_space<vmem>>, %arg5: memref<16x128xf32, #tpu.memory_space<vmem>>) attributes {dimension_semantics = [#tpu.dimension_semantics<parallel>, #tpu.dimension_semantics<parallel>, #tpu.dimension_semantics<arbitrary>], iteration_bounds = array<i64: 1, 1, 1>, scalar_prefetch = 0 : i64, scratch_operands = 0 : i64, tpu.core_type = #tpu.core_type<tc>, window_params = [{transform_indices = @transform_0, window_bounds = array<i64: 16, 128>}, {transform_indices = @transform_1, window_bounds = array<i64: 128, 128>}, {transform_indices = @transform_2, window_bounds = array<i64: 16, 128>}]} {
    %c0_i32 = arith.constant 0 : i32
    %0 = arith.cmpi eq, %arg2, %c0_i32 : i32
    %1 = arith.extui %0 : i1 to i32
    %c0_i32_0 = arith.constant 0 : i32
    %2 = arith.cmpi ne, %1, %c0_i32_0 : i32
    scf.if %2 {
      %cst_8 = arith.constant 0.000000e+00 : f32
      %9 = vector.broadcast %cst_8 : f32 to vector<16x128xf32>
      %c0_9 = arith.constant 0 : index
      %c0_10 = arith.constant 0 : index
      %10 = vector.load %arg5[%c0_9, %c0_10] : memref<16x128xf32, #tpu.memory_space<vmem>>, vector<16x128xf32>
      tpu.vector_store %arg5[%c0_9, %c0_10], %9 {strides = array<i32>} : memref<16x128xf32, #tpu.memory_space<vmem>>, vector<16x128xf32>,
    } else {
    }
    %c0 = arith.constant 0 : index
    %c0_1 = arith.constant 0 : index
    %3 = vector.load %arg5[%c0, %c0_1] : memref<16x128xf32, #tpu.memory_space<vmem>>, vector<16x128xf32>
    %c0_2 = arith.constant 0 : index
    %c0_3 = arith.constant 0 : index
    %4 = vector.load %arg3[%c0_2, %c0_3] : memref<16x128xf32, #tpu.memory_space<vmem>>, vector<16x128xf32>
    %c0_4 = arith.constant 0 : index
    %c0_5 = arith.constant 0 : index
    %5 = vector.load %arg4[%c0_4, %c0_5] : memref<128x128xf32, #tpu.memory_space<vmem>>, vector<128x128xf32>
    %cst = arith.constant dense<0.000000e+00> : vector<16x128xf32>
    %6 = tpu.matmul %4, %5, %cst {dimension_numbers = #tpu.dot_dimension_numbers<[1], [0], [0], [1], [0, 0, 1, 1], [], []>} : vector<16x128xf32>, vector<128x128xf32>, vector<16x128xf32> -> vector<16x128xf32>
    %7 = arith.addf %3, %6 : vector<16x128xf32>
    %c0_6 = arith.constant 0 : index
    %c0_7 = arith.constant 0 : index
    %8 = vector.load %arg5[%c0_6, %c0_7] : memref<16x128xf32, #tpu.memory_space<vmem>>, vector<16x128xf32>
    tpu.vector_store %arg5[%c0_6, %c0_7], %7 {strides = array<i32>} : memref<16x128xf32, #tpu.memory_space<vmem>>, vector<16x128xf32>,
    return
  }
  func.func @transform_0(%arg0: i32, %arg1: i32, %arg2: i32) -> (i32, i32) {
    %c0_i32 = arith.constant 0 : i32
    return %arg0, %arg2 : i32, i32
  }
  func.func @transform_1(%arg0: i32, %arg1: i32, %arg2: i32) -> (i32, i32) {
    %c0_i32 = arith.constant 0 : i32
    return %arg2, %arg1 : i32, i32
  }
  func.func @transform_2(%arg0: i32, %arg1: i32, %arg2: i32) -> (i32, i32) {
    %c0_i32 = arith.constant 0 : i32
    return %arg0, %arg1 : i32, i32
  }
}

</mosaic_0001>

<llo_original>
// kernel: _linear_impl.1
$region0: #{_linear_impl.1}
  #allocation0 [shape = 'u32[]', space=smem, size = 0x4, offset = 0x4, fixed_abs, tag = 'smem constant byte address 0x4 - core index']
  #allocation1 [shape = 'u32[72,128]{1,0:T(1,128)}', space=vmem, size = 0x9000, scoped, tag = 'internal scratch']
  %s0 = inlined_call_operand.vmem [shape: f32[16,128], index: 0, kind: input, shape index: {}]
  %s1 = inlined_call_operand.vmem [shape: f32[128,128], index: 1, kind: input, shape index: {}]
  %s2 = inlined_call_operand.hbm [shape: f32[16,128], index: 2, kind: output, shape index: {}]
  %s3 = sld [smem:[#allocation0]]
  $region22: #{_linear_impl.1} parent=0
    _
  %s5 = ssub.s32 1, %s3
  %s6 = scalar_select 0, %s5, %s3
  $region1: #{_linear_impl.1} parent=0
    #allocation2 [shape = 'u8[8192]{0}', space=vmem, size = 0x2000, scoped, tag = 'output window, operand 0, single buffered']
    #allocation3 [shape = 's32[1]{0}', space=sflag, size = 0x4, scoped, tag = 'scoped memory for _linear_impl.1']
    %7 = vsyncpa [#allocation3], 0
    // Predicated region
    $region2: #{_linear_impl.1} parent=1 // pred_check
      _
    $region3: #{_linear_impl.1} parent=1 // pred_check_branch
      %9 = sbr.rel (0) target = $region5
    $region4: #{_linear_impl.1} parent=1 // pred_region
      _
    $region5: #{_linear_impl.1} parent=1 // pred_fallthru
      _
    // Predicated region
    $region6: #{_linear_impl.1} parent=1 // pred_check
      _
    $region7: #{_linear_impl.1} parent=1 // pred_check_branch
      %11 = sbr.rel (0) target = $region9
    $region8: #{_linear_impl.1} parent=1 // pred_region
      _
    $region9: #{_linear_impl.1} parent=1 // pred_fallthru
      _
    %p12 = scmp.eq.s32.totalorder 0, 0
    // Predicated region
    $region10: #{_linear_impl.1} parent=1 // pred_check
      %p13 = pneg %p12
    $region11: #{_linear_impl.1} parent=1 // pred_check_branch
      %15 = sbr.rel (%p13) target = $region13
    $region12: #{_linear_impl.1} parent=1 // pred_region
      %16 = vst [vmem:[#allocation2] sm:$0xff] 0.0
      %17 = vst [vmem:[#allocation2 + $0x8] sm:$0xff] 0.0
    $region13: #{_linear_impl.1} parent=1 // pred_fallthru
      _
    %v18 = vld [vmem:[#allocation2] sm:$0xff]
    %v19 = vld [vmem:[#allocation2 + $0x8] sm:$0xff]
    %v20 = vld [vmem:[%s0] sm:$0xff]
    %v21 = vld [vmem:[%s0 + $0x8] sm:$0xff]
    %v22 = vld [vmem:[%s1] sm:$0xff]
    %v23 = vld [vmem:[%s1 + $0x8] sm:$0xff]
    %v24 = vld [vmem:[%s1 + $0x10] sm:$0xff]
    %v25 = vld [vmem:[%s1 + $0x18] sm:$0xff]
    %v26 = vld [vmem:[%s1 + $0x20] sm:$0xff]
    %v27 = vld [vmem:[%s1 + $0x28] sm:$0xff]
    %v28 = vld [vmem:[%s1 + $0x30] sm:$0xff]
    %v29 = vld [vmem:[%s1 + $0x38] sm:$0xff]
    %v30 = vld [vmem:[%s1 + $0x40] sm:$0xff]
    %v31 = vld [vmem:[%s1 + $0x48] sm:$0xff]
    %v32 = vld [vmem:[%s1 + $0x50] sm:$0xff]
    %v33 = vld [vmem:[%s1 + $0x58] sm:$0xff]
    %v34 = vld [vmem:[%s1 + $0x60] sm:$0xff]
    %v35 = vld [vmem:[%s1 + $0x68] sm:$0xff]
    %v36 = vld [vmem:[%s1 + $0x70] sm:$0xff]
    %v37 = vld [vmem:[%s1 + $0x78] sm:$0xff]
    %38 = vmatpush.msra.mxu0 %v37
    %39 = vmatpush.msra.mxu0 %v36
    %40 = vmatpush.msra.mxu0 %v35
    %41 = vmatpush.msra.mxu0 %v34
    %42 = vmatpush.msra.mxu0 %v33
    %43 = vmatpush.msra.mxu0 %v32
    %44 = vmatpush.msra.mxu0 %v31
    %45 = vmatpush.msra.mxu0 %v30
    %46 = vmatpush.msra.mxu0 %v29
    %47 = vmatpush.msra.mxu0 %v28
    %48 = vmatpush.msra.mxu0 %v27
    %49 = vmatpush.msra.mxu0 %v26
    %50 = vmatpush.msra.mxu0 %v25
    %51 = vmatpush.msra.mxu0 %v24
    %52 = vmatpush.msra.mxu0 %v23
    %53 = vmatpush.msra.mxu0 %v22
    %54 = vmatmul.f32.gmra.mxu0 %v20
    %v55 = vpop.f32.mrf.mxu0
    %v56 = vadd.f32 0.0, %v55
    %57 = vmatmul.f32.gmra.mxu0 %v21
    %v58 = vpop.f32.mrf.mxu0
    %v59 = vadd.f32 0.0, %v58
    %60 = vdwg.mxu0
    %v61 = vadd.f32 %v18, %v56
    %v62 = vadd.f32 %v19, %v59
    %63 = vst [vmem:[#allocation2] sm:$0xff] %v61
    %64 = vst [vmem:[#allocation2 + $0x8] sm:$0xff] %v62
    // Predicated region
    $region14: #{_linear_impl.1} parent=1 // pred_check
      _
    $region15: #{_linear_impl.1} parent=1 // pred_check_branch
      %66 = sbr.rel (0) target = $region17
    $region16: #{_linear_impl.1} parent=1 // pred_region
      %68 = vsyncadd [#allocation3], 0
      %s69 = sshll.u32 [#allocation2], 4
      %s70 = int_to_ptr.vmem [resolvable:$true] %s69
      %s71 = sshll.u32 %s2, 4
      %s72 = int_to_ptr.hbm [resolvable:$true] %s71
      %77 = dma.vmem_to_hbm [thread:$0]  %s70, 256, %s72, [#allocation3], 128, 128, 8
    $region17: #{_linear_impl.1} parent=1 // pred_fallthru
      _
    // Predicated region
    $region18: #{_linear_impl.1} parent=1 // pred_check
      _
    $region19: #{_linear_impl.1} parent=1 // pred_check_branch
      %79 = sbr.rel (0) target = $region21
    $region20: #{_linear_impl.1} parent=1 // pred_region
      %81 = dma.done [#allocation3], 256
    $region21: #{_linear_impl.1} parent=1 // pred_fallthru
      _
    %82 = vsyncpa [#allocation3], 1

</llo_original>
